<compile_context>
chip_gen: v7x
topology: tpu7x:2x2x1
jax: 0.10.0
libtpu: 0.0.40
codegen_flags: <defaults>
</compile_context>

<pallas_src>
import functools

import jax
import jax.numpy as jnp
import numpy as np
from jax import lax
from jax.experimental import pallas as pl
from jax.experimental.pallas import tpu as pltpu


def _round_up(x, m):
    return ((x + m - 1) // m) * m


def _laplacian_kernel_body(x_ref, o_ref, *, ksize):
    # x_ref: (TB, H, W), o_ref: (TB, Ho, Wo) with Ho = H-k+1, Wo = W-k+1.
    k = ksize
    _, H, W = x_ref.shape
    Ho, Wo = H - k + 1, W - k + 1
    mid = k // 2

    if x_ref.dtype == jnp.float32:
        x = x_ref                               # slice the VMEM block directly
    else:
        x = x_ref[...].astype(jnp.float32)      # single up-cast pass for bf16 etc.

    # Vertical (sublane) running sum of height k.
    vsum = x[:, 0:Ho, :]
    for di in range(1, k):
        vsum = vsum + x[:, di:di + Ho, :]

    # Horizontal (lane) running sum of width k.
    box = vsum[:, :, 0:Wo]
    for dj in range(1, k):
        box = box + vsum[:, :, dj:dj + Wo]

    # Laplacian weights: -1 everywhere, k*k-1 at the center
    #   => conv = k*k * center - box.
    center = x[:, mid:mid + Ho, mid:mid + Wo]
    o_ref[...] = (float(k * k) * center - box).astype(o_ref.dtype)


def get_laplacian_kernel(kernel_size, dtype=jnp.float32):
    """Deterministic Laplacian kernel, identical to Laplacian.get_kernel()."""
    k = -jnp.ones((kernel_size, kernel_size), dtype=dtype)
    mid = kernel_size // 2
    return k.at[mid, mid].set(kernel_size ** 2 - 1.0)   # (k, k)


def laplacian(data, kernel_size=3):
    """Pallas implementation of Laplacian.forward.

    data: (B, 1, H, W) (NCHW; the registered (1,1,k,k) kernel implies C==1).
    returns: (B, 1, H-k+1, W-k+1)
    """
    B, C, H, W = data.shape
    assert C == 1, "Laplacian kernel has a single input channel"
    k = int(kernel_size)
    assert H >= k and W >= k, "spatial dims must be >= kernel_size"
    Ho, Wo = H - k + 1, W - k + 1

    itemsize = jnp.dtype(data.dtype).itemsize
    # VMEM footprint of one image / one output slab (layout-padded to (8,128)).
    in_tile = _round_up(H, 8) * _round_up(W, 128) * itemsize
    out_tile = _round_up(Ho, 8) * _round_up(Wo, 128) * itemsize
    tmp_tile = _round_up(H, 8) * _round_up(W, 128) * 4   # f32 temps (vsum/box/center)

    # Images per grid step: large enough to amortize the ~0.35 us/step overhead
    # (~6 MiB of in+out traffic per step), but keep at least min(B, 4) grid
    # steps so both v7x TensorCores get work from the "parallel" batch axis.
    target_step_bytes = 6 << 20
    tb_bytes = max(1, target_step_bytes // max(in_tile + out_tile, 1))
    tb_grid = max(1, B // min(B, 4))
    TB = int(max(1, min(B, tb_bytes, tb_grid)))
    grid = (pl.cdiv(B, TB),)   # ragged last block is fine: batches are independent

    # VMEM budget: double-buffered input + output blocks plus a few block-sized
    # f32 temps for the separable sums, with slack.
    # TODO(synk): for single images whose working set exceeds this budget (very
    # long spectrograms), add (k-1)-row halo tiling instead of whole-image blocks.
    needed = TB * (2 * (in_tile + out_tile) + 4 * tmp_tile) + (2 << 20)
    vmem_limit = int(min(max(needed, 16 << 20), 48 << 20))

    return pl.pallas_call(
        functools.partial(_laplacian_kernel_body, ksize=k),
        out_shape=jax.ShapeDtypeStruct((B, 1, Ho, Wo), data.dtype),
        grid=grid,
        in_specs=[pl.BlockSpec((TB, None, H, W), lambda b: (b, 0, 0, 0))],
        out_specs=pl.BlockSpec((TB, None, Ho, Wo), lambda b: (b, 0, 0, 0)),
        compiler_params=pltpu.CompilerParams(
            dimension_semantics=("parallel",),
            vmem_limit_bytes=vmem_limit),
    )(data)


def _reference(data, kernel_size=3):
    """Pure-JAX reference (lax conv == PyTorch F.conv2d cross-correlation)."""
    kern = get_laplacian_kernel(kernel_size, jnp.float32)[None, None]  # OIHW
    return lax.conv_general_dilated(
        data, kern, window_strides=(1, 1), padding="VALID",
        dimension_numbers=("NCHW", "OIHW", "NCHW"),
    )


if __name__ == "__main__":
    key = jax.random.PRNGKey(0)
    k0, k1 = jax.random.split(key)

    # Main check: (B, 1, 16, 16), kernel_size=3.
    x = jax.random.normal(k0, (2, 1, 16, 16), dtype=jnp.float32)
    out = jax.block_until_ready(laplacian(x, kernel_size=3))
    ref = jax.block_until_ready(_reference(x, kernel_size=3))
    np.testing.assert_allclose(np.asarray(out), np.asarray(ref), rtol=1e-5, atol=1e-5)

    # Docstring example (6x6 eye + flipped eye).
    d = jnp.eye(6, dtype=jnp.float32) + jnp.flip(jnp.eye(6, dtype=jnp.float32), 0)
    d = d[None, None]  # (1, 1, 6, 6)
    expected = jnp.array(
        [[6., -3., -3., 6.],
         [-3., 4., 4., -3.],
         [-3., 4., 4., -3.],
         [6., -3., -3., 6.]], dtype=jnp.float32)
    got = jax.block_until_ready(laplacian(d, kernel_size=3))
    np.testing.assert_allclose(np.asarray(got[0, 0]), np.asarray(expected), atol=1e-5)

    # Odd, non-square shapes with a larger kernel.
    x2 = jax.random.normal(k1, (3, 1, 13, 21), dtype=jnp.float32)
    out2 = jax.block_until_ready(laplacian(x2, kernel_size=5))
    ref2 = jax.block_until_ready(_reference(x2, kernel_size=5))
    np.testing.assert_allclose(np.asarray(out2), np.asarray(ref2), rtol=1e-5, atol=1e-5)

    print("KERNEL_OK")
</pallas_src>

<mosaic_0001>
module attributes {stable_mosaic.version = 11 : i64} {
  func.func @_laplacian_kernel_body(%arg0: i32, %arg1: memref<1x1x16x16xf32, #tpu.memory_space<vmem>>, %arg2: memref<1x1x14x14xf32, #tpu.memory_space<vmem>>) attributes {dimension_semantics = [#tpu.dimension_semantics<parallel>], iteration_bounds = array<i64: 2>, scalar_prefetch = 0 : i64, scratch_operands = 0 : i64, tpu.core_type = #tpu.core_type<tc>, window_params = [{transform_indices = @transform_0, window_bounds = array<i64: 1, 1, 16, 16>}, {transform_indices = @transform_1, window_bounds = array<i64: 1, 1, 14, 14>}]} {
    %c0 = arith.constant 0 : index
    %c0_0 = arith.constant 0 : index
    %c0_1 = arith.constant 0 : index
    %c0_2 = arith.constant 0 : index
    %0 = vector.load %arg1[%c0, %c0_0, %c0_1, %c0_2] : memref<1x1x16x16xf32, #tpu.memory_space<vmem>>, vector<1x1x14x16xf32>
    %1 = vector.shape_cast %0 : vector<1x1x14x16xf32> to vector<1x14x16xf32>
    %c0_3 = arith.constant 0 : index
    %c0_4 = arith.constant 0 : index
    %c1 = arith.constant 1 : index
    %c0_5 = arith.constant 0 : index
    %2 = vector.load %arg1[%c0_3, %c0_4, %c1, %c0_5] : memref<1x1x16x16xf32, #tpu.memory_space<vmem>>, vector<1x1x14x16xf32>
    %3 = vector.shape_cast %2 : vector<1x1x14x16xf32> to vector<1x14x16xf32>
    %4 = arith.addf %1, %3 : vector<1x14x16xf32>
    %c0_6 = arith.constant 0 : index
    %c0_7 = arith.constant 0 : index
    %c2 = arith.constant 2 : index
    %c0_8 = arith.constant 0 : index
    %5 = vector.load %arg1[%c0_6, %c0_7, %c2, %c0_8] : memref<1x1x16x16xf32, #tpu.memory_space<vmem>>, vector<1x1x14x16xf32>
    %6 = vector.shape_cast %5 : vector<1x1x14x16xf32> to vector<1x14x16xf32>
    %7 = arith.addf %4, %6 : vector<1x14x16xf32>
    %8 = vector.extract_strided_slice %7 {offsets = [0, 0, 0], sizes = [1, 14, 14], strides = [1, 1, 1]} : vector<1x14x16xf32> to vector<1x14x14xf32>
    %9 = vector.extract_strided_slice %7 {offsets = [0, 0, 1], sizes = [1, 14, 14], strides = [1, 1, 1]} : vector<1x14x16xf32> to vector<1x14x14xf32>
    %10 = arith.addf %8, %9 : vector<1x14x14xf32>
    %11 = vector.extract_strided_slice %7 {offsets = [0, 0, 2], sizes = [1, 14, 14], strides = [1, 1, 1]} : vector<1x14x16xf32> to vector<1x14x14xf32>
    %12 = arith.addf %10, %11 : vector<1x14x14xf32>
    %c0_9 = arith.constant 0 : index
    %c0_10 = arith.constant 0 : index
    %c1_11 = arith.constant 1 : index
    %c1_12 = arith.constant 1 : index
    %13 = vector.load %arg1[%c0_9, %c0_10, %c1_11, %c1_12] : memref<1x1x16x16xf32, #tpu.memory_space<vmem>>, vector<1x1x14x14xf32>
    %14 = vector.shape_cast %13 : vector<1x1x14x14xf32> to vector<1x14x14xf32>
    %cst = arith.constant 9.000000e+00 : f32
    %15 = vector.broadcast %cst : f32 to vector<1x14x14xf32>
    %16 = arith.mulf %15, %14 : vector<1x14x14xf32>
    %17 = arith.subf %16, %12 : vector<1x14x14xf32>
    %c0_13 = arith.constant 0 : index
    %c0_14 = arith.constant 0 : index
    %c0_15 = arith.constant 0 : index
    %c0_16 = arith.constant 0 : index
    %18 = vector.load %arg2[%c0_13, %c0_14, %c0_15, %c0_16] : memref<1x1x14x14xf32, #tpu.memory_space<vmem>>, vector<1x1x14x14xf32>
    %19 = vector.shape_cast %18 : vector<1x1x14x14xf32> to vector<1x14x14xf32>
    %20 = vector.shape_cast %17 : vector<1x14x14xf32> to vector<1x1x14x14xf32>
    tpu.vector_store %arg2[%c0_13, %c0_14, %c0_15, %c0_16], %20 {strides = array<i32>} : memref<1x1x14x14xf32, #tpu.memory_space<vmem>>, vector<1x1x14x14xf32>,
    return
  }
  func.func @transform_0(%arg0: i32) -> (i32, i32, i32, i32) {
    %c0_i32 = arith.constant 0 : i32
    %c0_i32_0 = arith.constant 0 : i32
    %c0_i32_1 = arith.constant 0 : i32
    %c0_i32_2 = arith.constant 0 : i32
    return %arg0, %c0_i32, %c0_i32_0, %c0_i32_1 : i32, i32, i32, i32
  }
  func.func @transform_1(%arg0: i32) -> (i32, i32, i32, i32) {
    %c0_i32 = arith.constant 0 : i32
    %c0_i32_0 = arith.constant 0 : i32
    %c0_i32_1 = arith.constant 0 : i32
    %c0_i32_2 = arith.constant 0 : i32
    return %arg0, %c0_i32, %c0_i32_0, %c0_i32_1 : i32, i32, i32, i32
  }
}

</mosaic_0001>

<llo_original>
// kernel: tpu_custom_call.1
$region0: #{tpu_custom_call.1}
  #allocation0 [shape = 'u32[]', space=smem, size = 0x4, offset = 0x4, fixed_abs, tag = 'smem constant byte address 0x4 - core index']
  #allocation1 [shape = 'u32[144,128]{1,0:T(1,128)}', space=vmem, size = 0x12000, scoped, tag = 'internal scratch']
  %s0 = inlined_call_operand.hbm [shape: f32[2,1,16,16], index: 0, kind: input, shape index: {}]
  %s1 = inlined_call_operand.vmem [shape: f32[2,1,14,14], index: 1, kind: output, shape index: {}]
  %s2 = sld [smem:[#allocation0]]
  $region41: #{tpu_custom_call.1} parent=0
    _
  %s4 = ssub.s32 1, %s2
  %s5 = scalar_select 0, %s4, %s2
  $region1: #{tpu_custom_call.1} parent=0
    #allocation2 [shape = 'u8[16384]{0}', space=vmem, size = 0x4000, scoped, tag = 'input window, operand 0']
    #allocation3 [shape = 's32[2]{0}', space=sflag, size = 0x8, scoped, tag = 'scoped memory for tpu_custom_call.1']
    %6 = vsyncpa [#allocation3], 0
    %s7 = scalar_lea.sflag [#allocation3], 1
    %8 = vsyncpa %s7, 0
    loop: start=0, step=1, limit=4
    $region2: #{tpu_custom_call.1} parent=1 // loop_pre_header
      _
    $region3: #{tpu_custom_call.1} parent=1 // loop_header
      %s10 = sphi 0, %s14
      %p11 = scmp.ge.s32.totalorder %s10, 4
      %s20 = sphi 0, %s22
      %s23 = sphi 0, %s20
      %s24 = sphi 0, %s23
      %s40 = sphi 0, %s24
      %s46 = sphi 0, %s48
      %s49 = sphi 0, %s46
      %s50 = sphi 0, %s49
      %s66 = sphi 0, %s50
    $region4: #{tpu_custom_call.1} parent=1 // loop_header_branch
      %13 = sbr.rel (%p11) target = $region8
    $region5: #{tpu_custom_call.1} parent=1 // loop_body
      %s15 = ssub.s32 %s10, 1
      %s16 = ssub.s32 %s10, 2
      %s17 = sadd.s32 %s10, 1
      %s18 = ssub.s32 %s10, %s17
      %p19 = scmp.eq.s32.totalorder %s18, 0
      %s21 = sadd.s32 %s20, 1
      %s22 = scalar_select %p19, %s20, %s21
      %p25 = pneg %p19
      %p26 = scmp.eq.s32.totalorder %s10, 1
      %p27 = por %p25, %p26
      %p28 = scmp.ne.s32.totalorder %s20, %s23
      %p29 = scmp.eq.s32.totalorder %s10, 0
      %p30 = por %p28, %p29
      %p31 = scmp.ne.s32.totalorder %s20, %s23
      %p32 = scmp.eq.s32.totalorder %s15, 1
      %p33 = por %p31, %p32
      %p34 = scmp.ne.s32.totalorder %s23, %s24
      %p35 = scmp.eq.s32.totalorder %s15, 0
      %p36 = por %p34, %p35
      %p37 = scmp.ne.s32.totalorder %s23, %s24
      %p38 = scmp.eq.s32.totalorder %s16, 1
      %p39 = por %p37, %p38
      %p41 = scmp.ne.s32.totalorder %s24, %s40
      %p42 = scmp.eq.s32.totalorder %s16, 0
      %p43 = por %p41, %p42
      %s44 = ssub.s32 %s10, %s17
      %p45 = scmp.eq.s32.totalorder %s44, 0
      %s47 = sadd.s32 %s46, 1
      %s48 = scalar_select %p45, %s46, %s47
      %p51 = pneg %p45
      %p52 = scmp.eq.s32.totalorder %s10, 1
      %p53 = por %p51, %p52
      %p54 = scmp.ne.s32.totalorder %s46, %s49
      %p55 = scmp.eq.s32.totalorder %s10, 0
      %p56 = por %p54, %p55
      %p57 = scmp.ne.s32.totalorder %s46, %s49
      %p58 = scmp.eq.s32.totalorder %s15, 1
      %p59 = por %p57, %p58
      %p60 = scmp.ne.s32.totalorder %s49, %s50
      %p61 = scmp.eq.s32.totalorder %s15, 0
      %p62 = por %p60, %p61
      %p63 = scmp.ne.s32.totalorder %s49, %s50
      %p64 = scmp.eq.s32.totalorder %s16, 1
      %p65 = por %p63, %p64
      %p67 = scmp.ne.s32.totalorder %s50, %s66
      %p68 = scmp.eq.s32.totalorder %s16, 0
      %p69 = por %p67, %p68
      %p70 = scmp.le.s32.totalorder 1, %s10
      %p71 = scmp.lt.s32.totalorder %s10, 3
      %p72 = pnand %p70, %p71
      %p73 = pneg %p72
      // Predicated region
      $region9: #{tpu_custom_call.1} parent=5 // pred_check
        _
      $region10: #{tpu_custom_call.1} parent=5 // pred_check_branch
        %75 = sbr.rel (%p72) target = $region12
      $region11: #{tpu_custom_call.1} parent=5 // pred_region
        %s76 = ssub.s32 %s10, 1
      $region12: #{tpu_custom_call.1} parent=5 // pred_fallthru
        _
      %p77 = scmp.lt.s32.totalorder %s10, 2
      // Predicated region
      $region13: #{tpu_custom_call.1} parent=5 // pred_check
        %p78 = pneg %p77
      $region14: #{tpu_custom_call.1} parent=5 // pred_check_branch
        %80 = sbr.rel (%p78) target = $region16
      $region15: #{tpu_custom_call.1} parent=5 // pred_region
        // Predicated region
        $region17: #{tpu_custom_call.1} parent=15 // pred_check
          %p81 = pneg %p30
        $region18: #{tpu_custom_call.1} parent=15 // pred_check_branch
          %83 = sbr.rel (%p81) target = $region20
        $region19: #{tpu_custom_call.1} parent=15 // pred_region
          %s84 = sand.u32 %s20, 1
          %s85 = scalar_lea.sflag [#allocation3], %s84
          %s86 = sand.u32 %s20, 1
          %s87 = smul.addr %s86, 16
          %s88 = scalar_lea.vmem [#allocation2], %s87
          %s90 = ssub.s32 256, 256
          %91 = vsyncadd %s85, %s90
          %s92 = smul.addr %s10, 2
          %s93 = smul.addr %s92, 128
          %s94 = scalar_lea.hbm %s0, %s93
          %s95 = sshll.u32 %s88, 4
          %s96 = int_to_ptr.vmem [resolvable:$true] %s95
          %101 = dma.hbm_to_vmem [thread:$0]  %s94, 256, %s96, %s85, 128, 128, 8
        $region20: #{tpu_custom_call.1} parent=15 // pred_fallthru
          _
      $region16: #{tpu_custom_call.1} parent=5 // pred_fallthru
        _
      %p102 = scmp.le.s32.totalorder 1, %s10
      %p103 = scmp.lt.s32.totalorder %s10, 3
      %p104 = pnand %p102, %p103
      %p105 = pneg %p104
      // Predicated region
      $region21: #{tpu_custom_call.1} parent=5 // pred_check
        _
      $region22: #{tpu_custom_call.1} parent=5 // pred_check_branch
        %107 = sbr.rel (%p104) target = $region24
      $region23: #{tpu_custom_call.1} parent=5 // pred_region
        %s108 = ssub.s32 %s10, 1
        %s109 = sand.u32 %s23, 1
        %s110 = scalar_lea.sflag [#allocation3], %s109
        %s111 = sand.u32 %s23, 1
        %s112 = smul.addr %s111, 16
        %s113 = scalar_lea.vmem [#allocation2], %s112
        // Predicated region
        $region25: #{tpu_custom_call.1} parent=23 // pred_check
          %p114 = pneg %p36
        $region26: #{tpu_custom_call.1} parent=23 // pred_check_branch
          %116 = sbr.rel (%p114) target = $region28
        $region27: #{tpu_custom_call.1} parent=23 // pred_region
          %117 = dma.done %s110, 256
        $region28: #{tpu_custom_call.1} parent=23 // pred_fallthru
          _
        %s118 = sand.u32 %s23, 1
        %s119 = scalar_lea.sflag [#allocation3], %s118
        %s120 = sand.u32 %s23, 1
        %s121 = smul.addr %s120, 16
        %s122 = scalar_lea.vmem [#allocation2], %s121
        %p123 = pneg %p36
        %p124 = pneg %p33
        %p125 = pneg %p62
        %p126 = pneg %p59
        %p127 = scmp.lt.s32.totalorder %s15, 1
        %s128 = scalar_select %p127, %s15, 1
        %s129 = smul.addr %s128, 2
        %s130 = smul.addr %s129, 8
        %s131 = scalar_lea.vmem %s1, %s130
        %p132 = scmp.lt.s32.totalorder %s15, 1
        %s133 = scalar_select %p132, %s15, 1
        %s134 = smul.addr %s133, 2
        %s135 = smul.addr %s134, 8
        %s136 = scalar_lea.vmem %s1, %s135
        %v137 = vld [vmem:[%s113] sm:$0xff]
        %v138 = vld [vmem:[%s113 + $0x8] sm:$0x3f]
        %v139 = vld [vmem:[%s113 + $0x1] sm:$0xff]
        %v140 = vld [vmem:[%s113 + $0x9] sm:$0x3f]
        %v141 = vadd.f32 %v137, %v139
        %v142 = vadd.f32 %v138, %v140
        %v143 = vld [vmem:[%s113 + $0x2] sm:$0xff]
        %v144 = vld [vmem:[%s113 + $0xa] sm:$0x3f]
        %v145 = vadd.f32 %v141, %v143
        %v146 = vadd.f32 %v142, %v144
        %149 = vrot.lane.b32.xlu0 %v145, 127
        %v150 = vpop.permute.xlu0 %149
        %151 = vrot.lane.b32.xlu0 %v146, 127
        %v152 = vpop.permute.xlu0 %151
        %v155 = vadd.f32 %v145, %v150
        %v156 = vadd.f32 %v146, %v152
        %157 = vrot.lane.b32.xlu0 %v145, 126
        %v158 = vpop.permute.xlu0 %157
        %159 = vrot.lane.b32.xlu0 %v146, 126
        %v160 = vpop.permute.xlu0 %159
        %v163 = vadd.f32 %v155, %v158
        %v164 = vadd.f32 %v156, %v160
        %v165 = vmul.f32 %v139, 9.0
        %v166 = vmul.f32 %v140, 9.0
        %169 = vrot.lane.b32.xlu0 %v163, 1
        %v170 = vpop.permute.xlu0 %169
        %171 = vrot.lane.b32.xlu0 %v164, 1
        %v172 = vpop.permute.xlu0 %171
        %v175 = vsub.f32 %v165, %v170
        %v176 = vsub.f32 %v166, %v172
        %179 = vrot.lane.b32.xlu0 %v175, 127
        %v180 = vpop.permute.xlu0 %179
        %181 = vrot.lane.b32.xlu0 %v176, 127
        %v182 = vpop.permute.xlu0 %181
        %vm185 = vcmask 113664
        %186 = vst.msk [vmem:[%s136] sm:$0xff] %vm185, %v180
        %vm187 = vcmask 111616
        %188 = vst.msk [vmem:[%s136 + $0x8] sm:$0x3f] %vm187, %v182
        %p189 = scmp.lt.s32.totalorder %s15, 1
        %s190 = scalar_select %p189, %s15, 1
        %s191 = smul.addr %s190, 2
        %s192 = smul.addr %s191, 8
        %s193 = scalar_lea.vmem %s1, %s192
        // Predicated region
        $region29: #{tpu_custom_call.1} parent=23 // pred_check
          %p194 = pneg %p59
        $region30: #{tpu_custom_call.1} parent=23 // pred_check_branch
          %196 = sbr.rel (%p194) target = $region32
        $region31: #{tpu_custom_call.1} parent=23 // pred_region
          _
        $region32: #{tpu_custom_call.1} parent=23 // pred_fallthru
          _
      $region24: #{tpu_custom_call.1} parent=5 // pred_fallthru
        _
      %p197 = scmp.le.s32.totalorder 2, %s10
      // Predicated region
      $region33: #{tpu_custom_call.1} parent=5 // pred_check
        %p198 = pneg %p197
      $region34: #{tpu_custom_call.1} parent=5 // pred_check_branch
        %200 = sbr.rel (%p198) target = $region36
      $region35: #{tpu_custom_call.1} parent=5 // pred_region
        %s201 = ssub.s32 %s10, 2
        // Predicated region
        $region37: #{tpu_custom_call.1} parent=35 // pred_check
          %p202 = pneg %p65
        $region38: #{tpu_custom_call.1} parent=35 // pred_check_branch
          %204 = sbr.rel (%p202) target = $region40
        $region39: #{tpu_custom_call.1} parent=35 // pred_region
          %p205 = scmp.lt.s32.totalorder %s16, 1
          %s206 = scalar_select %p205, %s16, 1
          %s207 = smul.addr %s206, 2
          %s208 = smul.addr %s207, 8
          %s209 = scalar_lea.vmem %s1, %s208
        $region40: #{tpu_custom_call.1} parent=35 // pred_fallthru
          _
      $region36: #{tpu_custom_call.1} parent=5 // pred_fallthru
        _
    $region6: #{tpu_custom_call.1} parent=1 // loop_footer
      %s14 = sadd.s32 1, %s10
    $region7: #{tpu_custom_call.1} parent=1 // loop_footer_branch
      %9 = sbr.rel target = $region3
    $region8: #{tpu_custom_call.1} parent=1 // loop_exit
      _
    %210 = vsyncpa [#allocation3], 1
    %s211 = scalar_lea.sflag [#allocation3], 1
    %212 = vsyncpa %s211, 1

</llo_original>
